<compile_context>
chip_gen: v7x
topology: tpu7x:2x2x1
jax: 0.10.0
libtpu: 0.0.40
codegen_flags: <defaults>
</compile_context>

<pallas_src>
import functools
import math

import jax
import jax.numpy as jnp
from jax import lax
from jax.experimental import pallas as pl
from jax.experimental.pallas import tpu as pltpu

_SUB = 8        # f32 sublane tile
_LANE = 128     # lane tile
_INV_LN10 = 1.0 / math.log(10.0)


def _round_up(x, m):
    return ((x + m - 1) // m) * m


def _graph_based_loss_kernel(data_ref, out_ref, *, k, rows, cols):
    """Fused top-k selection + pairwise weighted-BCE ranking loss (one instance).

    data_ref: (2, L) f32 VMEM.  sublane 0 = scores (zero-padded past n),
              sublane 1 = pnl   (-inf-padded past n, so padding is never picked).
    out_ref:  (1, 1) f32 VMEM -- the scalar loss.
    k:        static number of selected items, k = min(top_k, n) >= 1.
    rows/cols: static pairwise-tile dims (k rounded up to (8, 128)).
    """
    L = data_ref.shape[1]
    scores = data_ref[0:1, :]        # (1, L)
    remaining = data_ref[1:2, :]     # (1, L) pnl pool; picked lanes -> -inf

    lane_full = lax.broadcasted_iota(jnp.int32, (1, L), 1)
    lane_full_f = lane_full.astype(jnp.float32)   # exact for any realistic L

    # Lane-indexed ("row") and sublane-indexed ("column") copies of the k
    # selected scores / pnl, built directly during the selection loop.
    lane_p = lax.broadcasted_iota(jnp.int32, (1, cols), 1)
    sub_p = lax.broadcasted_iota(jnp.int32, (rows, 1), 0)
    s_row = jnp.zeros((1, cols), jnp.float32)
    p_row = jnp.zeros((1, cols), jnp.float32)
    s_col = jnp.zeros((rows, 1), jnp.float32)
    p_col = jnp.zeros((rows, 1), jnp.float32)

    neg_inf = jnp.float32(-jnp.inf)
    big = jnp.float32(float(L))
    for t in range(k):  # k is a small static constant -> fully unrolled
        m = jnp.max(remaining, axis=1, keepdims=True)                   # (1,1) lane-max
        # First (lowest-lane) occurrence of the max: stable tie-break, keeps the
        # matching-score select exact even if pnl values repeat.  Done in f32 to
        # stay on the well-supported float lane-reduce path.
        first = jnp.min(jnp.where(remaining == m, lane_full_f, big),
                        axis=1, keepdims=True)                          # (1,1)
        pick = lane_full_f == first                                     # (1,L) one-hot
        s_val = jnp.sum(jnp.where(pick, scores, 0.0), axis=1, keepdims=True)  # (1,1)
        remaining = jnp.where(pick, neg_inf, remaining)
        s_row = s_row + jnp.where(lane_p == t, s_val, 0.0)
        p_row = p_row + jnp.where(lane_p == t, m, 0.0)
        s_col = s_col + jnp.where(sub_p == t, s_val, 0.0)
        p_col = p_col + jnp.where(sub_p == t, m, 0.0)

    # Strict upper triangle of the k x k block inside the (rows, cols) tile.
    i = lax.broadcasted_iota(jnp.int32, (rows, cols), 0)
    j = lax.broadcasted_iota(jnp.int32, (rows, cols), 1)
    valid = (j > i) & (j < k)

    x = jnp.where(valid, s_col - s_row, 0.0)        # logits (score diffs * mask)
    pnl_d = jnp.where(valid, p_col - p_row, 0.0)    # pnl diffs (>= 0: pnl desc.)

    # log_normalize: log10(pnl_d + 1) == log1p(pnl_d) / ln(10); masked entries
    # give weight 0, so the log(2) BCE value there contributes nothing.
    weight = jnp.log1p(pnl_d) * jnp.float32(_INV_LN10)
    # BCE-with-logits with targets z == mask (x is already 0 on masked entries):
    # max(x,0) - x*1 + log1p(exp(-|x|)) == max(-x,0) + log1p(exp(-|x|)).
    bce = jnp.maximum(-x, 0.0) + jnp.log1p(jnp.exp(-jnp.abs(x)))

    total = jnp.sum(weight * bce, axis=1, keepdims=True)   # (rows, 1)
    total = jnp.sum(total, axis=0, keepdims=True)          # (1, 1)
    out_ref[...] = total * jnp.float32(1.0 / k)


@functools.partial(jax.jit, static_argnames=("top_k", "epsilon"))
def graph_based_loss(scores, target=None, pnl=None, *, top_k=6, epsilon=1e-8):
    """JAX/Pallas equivalent of GraphBasedLoss.forward(scores, target, pnl).

    `target` and `epsilon` are accepted for interface parity; like the torch
    forward(), neither affects the result (target is only gathered-and-dropped
    there, epsilon only appears in mad_normalize).
    """
    del target, epsilon
    if scores.ndim > 1 and scores.shape[-1] == 1:
        scores = jnp.squeeze(scores, axis=-1)
    n = scores.shape[0]
    k = min(top_k, n)
    if k == 0:
        # torch: sum over an empty set divided by len == 0 -> NaN.
        return jnp.float32(jnp.nan)

    L = _round_up(n, _LANE)
    rows = _round_up(k, _SUB)
    cols = _round_up(k, _LANE)

    # One packed (2, L) f32 VMEM operand: sublane 0 = scores (0-padded),
    # sublane 1 = pnl (-inf-padded so padding can never win the in-kernel top-k).
    s_pad = jnp.pad(scores.astype(jnp.float32), (0, L - n))
    p_pad = jnp.pad(pnl.astype(jnp.float32), (0, L - n),
                    constant_values=-jnp.inf)
    data = jnp.stack([s_pad, p_pad], axis=0)

    out = pl.pallas_call(
        functools.partial(_graph_based_loss_kernel, k=k, rows=rows, cols=cols),
        out_shape=jax.ShapeDtypeStruct((1, 1), jnp.float32),
        in_specs=[pl.BlockSpec(memory_space=pltpu.MemorySpace.VMEM)],
        out_specs=pl.BlockSpec(memory_space=pltpu.MemorySpace.VMEM),
    )(data)
    return out[0, 0]


def _reference_loss(scores, target, pnl, top_k=6):
    """Pure-JAX reference mirroring the torch module, for sanity checking."""
    del target
    if scores.ndim > 1 and scores.shape[-1] == 1:
        scores = jnp.squeeze(scores, axis=-1)
    k = min(top_k, scores.shape[0])
    sorted_pnl, idx = lax.top_k(pnl, k)
    s = scores[idx]
    score_diffs = s[:, None] - s[None, :]
    mask = jnp.triu(jnp.ones_like(score_diffs), k=1)
    pnl_diffs = (sorted_pnl[:, None] - sorted_pnl[None, :]) * mask
    w = jnp.log10(pnl_diffs + 1.0)
    x = score_diffs * mask
    z = mask
    bce = jnp.maximum(x, 0.0) - x * z + jnp.log1p(jnp.exp(-jnp.abs(x)))
    return jnp.sum(w * bce) / k


if __name__ == "__main__":
    key = jax.random.PRNGKey(0)
    k1, k2, k3 = jax.random.split(key, 3)

    num_items = 20
    scores = jax.random.normal(k1, (num_items,), dtype=jnp.float32)
    pnl = jax.random.uniform(k2, (num_items,), dtype=jnp.float32) * 10.0
    target = (jax.random.uniform(k3, (num_items,)) > 0.5).astype(jnp.float32)

    loss = graph_based_loss(scores, target, pnl, top_k=6)
    loss = jax.block_until_ready(loss)

    ref = jax.block_until_ready(_reference_loss(scores, target, pnl, top_k=6))
    assert jnp.allclose(loss, ref, rtol=1e-5, atol=1e-5), (loss, ref)

    print("KERNEL_OK")
</pallas_src>

<mosaic_0001>
module attributes {stable_mosaic.version = 11 : i64} {
  func.func @_graph_based_loss_kernel(%arg0: memref<2x128xf32, #tpu.memory_space<vmem>>, %arg1: memref<1x1xf32, #tpu.memory_space<vmem>>) attributes {dimension_semantics = [], scalar_prefetch = 0 : i64, scratch_operands = 0 : i64, tpu.core_type = #tpu.core_type<tc>} {
    %c0 = arith.constant 0 : index
    %c0_0 = arith.constant 0 : index
    %0 = vector.load %arg0[%c0, %c0_0] : memref<2x128xf32, #tpu.memory_space<vmem>>, vector<1x128xf32>
    %c1 = arith.constant 1 : index
    %c0_1 = arith.constant 0 : index
    %1 = vector.load %arg0[%c1, %c0_1] : memref<2x128xf32, #tpu.memory_space<vmem>>, vector<1x128xf32>
    %2 = tpu.iota {dimensions = array<i32: 1>} : vector<1x128xi32>
    %3 = arith.sitofp %2 : vector<1x128xi32> to vector<1x128xf32>
    %4 = tpu.iota {dimensions = array<i32: 1>} : vector<1x128xi32>
    %5 = tpu.iota {dimensions = array<i32: 0>} : vector<8x1xi32>
    %cst = arith.constant 0.000000e+00 : f32
    %6 = vector.broadcast %cst : f32 to vector<1x128xf32>
    %cst_2 = arith.constant 0.000000e+00 : f32
    %7 = vector.broadcast %cst_2 : f32 to vector<1x128xf32>
    %cst_3 = arith.constant 0.000000e+00 : f32
    %8 = vector.broadcast %cst_3 : f32 to vector<8x1xf32>
    %cst_4 = arith.constant 0.000000e+00 : f32
    %9 = vector.broadcast %cst_4 : f32 to vector<8x1xf32>
    %cst_5 = arith.constant dense<0xFF800000> : vector<1xf32>
    %10 = vector.multi_reduction <maximumf>, %1, %cst_5 [1] : vector<1x128xf32> to vector<1xf32>
    %11 = vector.shape_cast %10 : vector<1xf32> to vector<1x1xf32>
    %12 = vector.broadcast %11 : vector<1x1xf32> to vector<1x128xf32>
    %13 = arith.cmpf oeq, %1, %12 : vector<1x128xf32>
    %cst_6 = arith.constant 1.280000e+02 : f32
    %14 = vector.broadcast %cst_6 : f32 to vector<1x128xf32>
    %15 = arith.select %13, %3, %14 : vector<1x128xi1>, vector<1x128xf32>
    %cst_7 = arith.constant dense<0x7F800000> : vector<1xf32>
    %16 = vector.multi_reduction <minimumf>, %15, %cst_7 [1] : vector<1x128xf32> to vector<1xf32>
    %17 = vector.shape_cast %16 : vector<1xf32> to vector<1x1xf32>
    %18 = vector.broadcast %17 : vector<1x1xf32> to vector<1x128xf32>
    %19 = arith.cmpf oeq, %3, %18 : vector<1x128xf32>
    %cst_8 = arith.constant 0.000000e+00 : f32
    %20 = vector.broadcast %cst_8 : f32 to vector<1x128xf32>
    %21 = arith.select %19, %0, %20 : vector<1x128xi1>, vector<1x128xf32>
    %cst_9 = arith.constant dense<0.000000e+00> : vector<1xf32>
    %22 = vector.multi_reduction <add>, %21, %cst_9 [1] : vector<1x128xf32> to vector<1xf32>
    %23 = vector.shape_cast %22 : vector<1xf32> to vector<1x1xf32>
    %cst_10 = arith.constant 0xFF800000 : f32
    %24 = vector.broadcast %cst_10 : f32 to vector<1x128xf32>
    %25 = arith.select %19, %24, %1 : vector<1x128xi1>, vector<1x128xf32>
    %c0_i32 = arith.constant 0 : i32
    %26 = vector.broadcast %c0_i32 : i32 to vector<1x128xi32>
    %27 = arith.cmpi eq, %4, %26 : vector<1x128xi32>
    %cst_11 = arith.constant 0.000000e+00 : f32
    %28 = vector.shape_cast %23 : vector<1x1xf32> to vector<1x1xf32>
    %29 = vector.broadcast %28 : vector<1x1xf32> to vector<1x128xf32>
    %30 = vector.broadcast %cst_11 : f32 to vector<1x128xf32>
    %31 = arith.select %27, %29, %30 : vector<1x128xi1>, vector<1x128xf32>
    %32 = arith.addf %6, %31 : vector<1x128xf32>
    %c0_i32_12 = arith.constant 0 : i32
    %33 = vector.broadcast %c0_i32_12 : i32 to vector<1x128xi32>
    %34 = arith.cmpi eq, %4, %33 : vector<1x128xi32>
    %cst_13 = arith.constant 0.000000e+00 : f32
    %35 = vector.shape_cast %11 : vector<1x1xf32> to vector<1x1xf32>
    %36 = vector.broadcast %35 : vector<1x1xf32> to vector<1x128xf32>
    %37 = vector.broadcast %cst_13 : f32 to vector<1x128xf32>
    %38 = arith.select %34, %36, %37 : vector<1x128xi1>, vector<1x128xf32>
    %39 = arith.addf %7, %38 : vector<1x128xf32>
    %c0_i32_14 = arith.constant 0 : i32
    %40 = vector.broadcast %c0_i32_14 : i32 to vector<8x1xi32>
    %41 = arith.cmpi eq, %5, %40 : vector<8x1xi32>
    %cst_15 = arith.constant 0.000000e+00 : f32
    %42 = vector.shape_cast %23 : vector<1x1xf32> to vector<1x1xf32>
    %43 = vector.broadcast %42 : vector<1x1xf32> to vector<8x1xf32>
    %44 = vector.broadcast %cst_15 : f32 to vector<8x1xf32>
    %45 = arith.select %41, %43, %44 : vector<8x1xi1>, vector<8x1xf32>
    %46 = arith.addf %8, %45 : vector<8x1xf32>
    %c0_i32_16 = arith.constant 0 : i32
    %47 = vector.broadcast %c0_i32_16 : i32 to vector<8x1xi32>
    %48 = arith.cmpi eq, %5, %47 : vector<8x1xi32>
    %cst_17 = arith.constant 0.000000e+00 : f32
    %49 = vector.shape_cast %11 : vector<1x1xf32> to vector<1x1xf32>
    %50 = vector.broadcast %49 : vector<1x1xf32> to vector<8x1xf32>
    %51 = vector.broadcast %cst_17 : f32 to vector<8x1xf32>
    %52 = arith.select %48, %50, %51 : vector<8x1xi1>, vector<8x1xf32>
    %53 = arith.addf %9, %52 : vector<8x1xf32>
    %cst_18 = arith.constant dense<0xFF800000> : vector<1xf32>
    %54 = vector.multi_reduction <maximumf>, %25, %cst_18 [1] : vector<1x128xf32> to vector<1xf32>
    %55 = vector.shape_cast %54 : vector<1xf32> to vector<1x1xf32>
    %56 = vector.broadcast %55 : vector<1x1xf32> to vector<1x128xf32>
    %57 = arith.cmpf oeq, %25, %56 : vector<1x128xf32>
    %cst_19 = arith.constant 1.280000e+02 : f32
    %58 = vector.broadcast %cst_19 : f32 to vector<1x128xf32>
    %59 = arith.select %57, %3, %58 : vector<1x128xi1>, vector<1x128xf32>
    %cst_20 = arith.constant dense<0x7F800000> : vector<1xf32>
    %60 = vector.multi_reduction <minimumf>, %59, %cst_20 [1] : vector<1x128xf32> to vector<1xf32>
    %61 = vector.shape_cast %60 : vector<1xf32> to vector<1x1xf32>
    %62 = vector.broadcast %61 : vector<1x1xf32> to vector<1x128xf32>
    %63 = arith.cmpf oeq, %3, %62 : vector<1x128xf32>
    %cst_21 = arith.constant 0.000000e+00 : f32
    %64 = vector.broadcast %cst_21 : f32 to vector<1x128xf32>
    %65 = arith.select %63, %0, %64 : vector<1x128xi1>, vector<1x128xf32>
    %cst_22 = arith.constant dense<0.000000e+00> : vector<1xf32>
    %66 = vector.multi_reduction <add>, %65, %cst_22 [1] : vector<1x128xf32> to vector<1xf32>
    %67 = vector.shape_cast %66 : vector<1xf32> to vector<1x1xf32>
    %cst_23 = arith.constant 0xFF800000 : f32
    %68 = vector.broadcast %cst_23 : f32 to vector<1x128xf32>
    %69 = arith.select %63, %68, %25 : vector<1x128xi1>, vector<1x128xf32>
    %c1_i32 = arith.constant 1 : i32
    %70 = vector.broadcast %c1_i32 : i32 to vector<1x128xi32>
    %71 = arith.cmpi eq, %4, %70 : vector<1x128xi32>
    %cst_24 = arith.constant 0.000000e+00 : f32
    %72 = vector.shape_cast %67 : vector<1x1xf32> to vector<1x1xf32>
    %73 = vector.broadcast %72 : vector<1x1xf32> to vector<1x128xf32>
    %74 = vector.broadcast %cst_24 : f32 to vector<1x128xf32>
    %75 = arith.select %71, %73, %74 : vector<1x128xi1>, vector<1x128xf32>
    %76 = arith.addf %32, %75 : vector<1x128xf32>
    %c1_i32_25 = arith.constant 1 : i32
    %77 = vector.broadcast %c1_i32_25 : i32 to vector<1x128xi32>
    %78 = arith.cmpi eq, %4, %77 : vector<1x128xi32>
    %cst_26 = arith.constant 0.000000e+00 : f32
    %79 = vector.shape_cast %55 : vector<1x1xf32> to vector<1x1xf32>
    %80 = vector.broadcast %79 : vector<1x1xf32> to vector<1x128xf32>
    %81 = vector.broadcast %cst_26 : f32 to vector<1x128xf32>
    %82 = arith.select %78, %80, %81 : vector<1x128xi1>, vector<1x128xf32>
    %83 = arith.addf %39, %82 : vector<1x128xf32>
    %c1_i32_27 = arith.constant 1 : i32
    %84 = vector.broadcast %c1_i32_27 : i32 to vector<8x1xi32>
    %85 = arith.cmpi eq, %5, %84 : vector<8x1xi32>
    %cst_28 = arith.constant 0.000000e+00 : f32
    %86 = vector.shape_cast %67 : vector<1x1xf32> to vector<1x1xf32>
    %87 = vector.broadcast %86 : vector<1x1xf32> to vector<8x1xf32>
    %88 = vector.broadcast %cst_28 : f32 to vector<8x1xf32>
    %89 = arith.select %85, %87, %88 : vector<8x1xi1>, vector<8x1xf32>
    %90 = arith.addf %46, %89 : vector<8x1xf32>
    %c1_i32_29 = arith.constant 1 : i32
    %91 = vector.broadcast %c1_i32_29 : i32 to vector<8x1xi32>
    %92 = arith.cmpi eq, %5, %91 : vector<8x1xi32>
    %cst_30 = arith.constant 0.000000e+00 : f32
    %93 = vector.shape_cast %55 : vector<1x1xf32> to vector<1x1xf32>
    %94 = vector.broadcast %93 : vector<1x1xf32> to vector<8x1xf32>
    %95 = vector.broadcast %cst_30 : f32 to vector<8x1xf32>
    %96 = arith.select %92, %94, %95 : vector<8x1xi1>, vector<8x1xf32>
    %97 = arith.addf %53, %96 : vector<8x1xf32>
    %cst_31 = arith.constant dense<0xFF800000> : vector<1xf32>
    %98 = vector.multi_reduction <maximumf>, %69, %cst_31 [1] : vector<1x128xf32> to vector<1xf32>
    %99 = vector.shape_cast %98 : vector<1xf32> to vector<1x1xf32>
    %100 = vector.broadcast %99 : vector<1x1xf32> to vector<1x128xf32>
    %101 = arith.cmpf oeq, %69, %100 : vector<1x128xf32>
    %cst_32 = arith.constant 1.280000e+02 : f32
    %102 = vector.broadcast %cst_32 : f32 to vector<1x128xf32>
    %103 = arith.select %101, %3, %102 : vector<1x128xi1>, vector<1x128xf32>
    %cst_33 = arith.constant dense<0x7F800000> : vector<1xf32>
    %104 = vector.multi_reduction <minimumf>, %103, %cst_33 [1] : vector<1x128xf32> to vector<1xf32>
    %105 = vector.shape_cast %104 : vector<1xf32> to vector<1x1xf32>
    %106 = vector.broadcast %105 : vector<1x1xf32> to vector<1x128xf32>
    %107 = arith.cmpf oeq, %3, %106 : vector<1x128xf32>
    %cst_34 = arith.constant 0.000000e+00 : f32
    %108 = vector.broadcast %cst_34 : f32 to vector<1x128xf32>
    %109 = arith.select %107, %0, %108 : vector<1x128xi1>, vector<1x128xf32>
    %cst_35 = arith.constant dense<0.000000e+00> : vector<1xf32>
    %110 = vector.multi_reduction <add>, %109, %cst_35 [1] : vector<1x128xf32> to vector<1xf32>
    %111 = vector.shape_cast %110 : vector<1xf32> to vector<1x1xf32>
    %cst_36 = arith.constant 0xFF800000 : f32
    %112 = vector.broadcast %cst_36 : f32 to vector<1x128xf32>
    %113 = arith.select %107, %112, %69 : vector<1x128xi1>, vector<1x128xf32>
    %c2_i32 = arith.constant 2 : i32
    %114 = vector.broadcast %c2_i32 : i32 to vector<1x128xi32>
    %115 = arith.cmpi eq, %4, %114 : vector<1x128xi32>
    %cst_37 = arith.constant 0.000000e+00 : f32
    %116 = vector.shape_cast %111 : vector<1x1xf32> to vector<1x1xf32>
    %117 = vector.broadcast %116 : vector<1x1xf32> to vector<1x128xf32>
    %118 = vector.broadcast %cst_37 : f32 to vector<1x128xf32>
    %119 = arith.select %115, %117, %118 : vector<1x128xi1>, vector<1x128xf32>
    %120 = arith.addf %76, %119 : vector<1x128xf32>
    %c2_i32_38 = arith.constant 2 : i32
    %121 = vector.broadcast %c2_i32_38 : i32 to vector<1x128xi32>
    %122 = arith.cmpi eq, %4, %121 : vector<1x128xi32>
    %cst_39 = arith.constant 0.000000e+00 : f32
    %123 = vector.shape_cast %99 : vector<1x1xf32> to vector<1x1xf32>
    %124 = vector.broadcast %123 : vector<1x1xf32> to vector<1x128xf32>
    %125 = vector.broadcast %cst_39 : f32 to vector<1x128xf32>
    %126 = arith.select %122, %124, %125 : vector<1x128xi1>, vector<1x128xf32>
    %127 = arith.addf %83, %126 : vector<1x128xf32>
    %c2_i32_40 = arith.constant 2 : i32
    %128 = vector.broadcast %c2_i32_40 : i32 to vector<8x1xi32>
    %129 = arith.cmpi eq, %5, %128 : vector<8x1xi32>
    %cst_41 = arith.constant 0.000000e+00 : f32
    %130 = vector.shape_cast %111 : vector<1x1xf32> to vector<1x1xf32>
    %131 = vector.broadcast %130 : vector<1x1xf32> to vector<8x1xf32>
    %132 = vector.broadcast %cst_41 : f32 to vector<8x1xf32>
    %133 = arith.select %129, %131, %132 : vector<8x1xi1>, vector<8x1xf32>
    %134 = arith.addf %90, %133 : vector<8x1xf32>
    %c2_i32_42 = arith.constant 2 : i32
    %135 = vector.broadcast %c2_i32_42 : i32 to vector<8x1xi32>
    %136 = arith.cmpi eq, %5, %135 : vector<8x1xi32>
    %cst_43 = arith.constant 0.000000e+00 : f32
    %137 = vector.shape_cast %99 : vector<1x1xf32> to vector<1x1xf32>
    %138 = vector.broadcast %137 : vector<1x1xf32> to vector<8x1xf32>
    %139 = vector.broadcast %cst_43 : f32 to vector<8x1xf32>
    %140 = arith.select %136, %138, %139 : vector<8x1xi1>, vector<8x1xf32>
    %141 = arith.addf %97, %140 : vector<8x1xf32>
    %cst_44 = arith.constant dense<0xFF800000> : vector<1xf32>
    %142 = vector.multi_reduction <maximumf>, %113, %cst_44 [1] : vector<1x128xf32> to vector<1xf32>
    %143 = vector.shape_cast %142 : vector<1xf32> to vector<1x1xf32>
    %144 = vector.broadcast %143 : vector<1x1xf32> to vector<1x128xf32>
    %145 = arith.cmpf oeq, %113, %144 : vector<1x128xf32>
    %cst_45 = arith.constant 1.280000e+02 : f32
    %146 = vector.broadcast %cst_45 : f32 to vector<1x128xf32>
    %147 = arith.select %145, %3, %146 : vector<1x128xi1>, vector<1x128xf32>
    %cst_46 = arith.constant dense<0x7F800000> : vector<1xf32>
    %148 = vector.multi_reduction <minimumf>, %147, %cst_46 [1] : vector<1x128xf32> to vector<1xf32>
    %149 = vector.shape_cast %148 : vector<1xf32> to vector<1x1xf32>
    %150 = vector.broadcast %149 : vector<1x1xf32> to vector<1x128xf32>
    %151 = arith.cmpf oeq, %3, %150 : vector<1x128xf32>
    %cst_47 = arith.constant 0.000000e+00 : f32
    %152 = vector.broadcast %cst_47 : f32 to vector<1x128xf32>
    %153 = arith.select %151, %0, %152 : vector<1x128xi1>, vector<1x128xf32>
    %cst_48 = arith.constant dense<0.000000e+00> : vector<1xf32>
    %154 = vector.multi_reduction <add>, %153, %cst_48 [1] : vector<1x128xf32> to vector<1xf32>
    %155 = vector.shape_cast %154 : vector<1xf32> to vector<1x1xf32>
    %cst_49 = arith.constant 0xFF800000 : f32
    %156 = vector.broadcast %cst_49 : f32 to vector<1x128xf32>
    %157 = arith.select %151, %156, %113 : vector<1x128xi1>, vector<1x128xf32>
    %c3_i32 = arith.constant 3 : i32
    %158 = vector.broadcast %c3_i32 : i32 to vector<1x128xi32>
    %159 = arith.cmpi eq, %4, %158 : vector<1x128xi32>
    %cst_50 = arith.constant 0.000000e+00 : f32
    %160 = vector.shape_cast %155 : vector<1x1xf32> to vector<1x1xf32>
    %161 = vector.broadcast %160 : vector<1x1xf32> to vector<1x128xf32>
    %162 = vector.broadcast %cst_50 : f32 to vector<1x128xf32>
    %163 = arith.select %159, %161, %162 : vector<1x128xi1>, vector<1x128xf32>
    %164 = arith.addf %120, %163 : vector<1x128xf32>
    %c3_i32_51 = arith.constant 3 : i32
    %165 = vector.broadcast %c3_i32_51 : i32 to vector<1x128xi32>
    %166 = arith.cmpi eq, %4, %165 : vector<1x128xi32>
    %cst_52 = arith.constant 0.000000e+00 : f32
    %167 = vector.shape_cast %143 : vector<1x1xf32> to vector<1x1xf32>
    %168 = vector.broadcast %167 : vector<1x1xf32> to vector<1x128xf32>
    %169 = vector.broadcast %cst_52 : f32 to vector<1x128xf32>
    %170 = arith.select %166, %168, %169 : vector<1x128xi1>, vector<1x128xf32>
    %171 = arith.addf %127, %170 : vector<1x128xf32>
    %c3_i32_53 = arith.constant 3 : i32
    %172 = vector.broadcast %c3_i32_53 : i32 to vector<8x1xi32>
    %173 = arith.cmpi eq, %5, %172 : vector<8x1xi32>
    %cst_54 = arith.constant 0.000000e+00 : f32
    %174 = vector.shape_cast %155 : vector<1x1xf32> to vector<1x1xf32>
    %175 = vector.broadcast %174 : vector<1x1xf32> to vector<8x1xf32>
    %176 = vector.broadcast %cst_54 : f32 to vector<8x1xf32>
    %177 = arith.select %173, %175, %176 : vector<8x1xi1>, vector<8x1xf32>
    %178 = arith.addf %134, %177 : vector<8x1xf32>
    %c3_i32_55 = arith.constant 3 : i32
    %179 = vector.broadcast %c3_i32_55 : i32 to vector<8x1xi32>
    %180 = arith.cmpi eq, %5, %179 : vector<8x1xi32>
    %cst_56 = arith.constant 0.000000e+00 : f32
    %181 = vector.shape_cast %143 : vector<1x1xf32> to vector<1x1xf32>
    %182 = vector.broadcast %181 : vector<1x1xf32> to vector<8x1xf32>
    %183 = vector.broadcast %cst_56 : f32 to vector<8x1xf32>
    %184 = arith.select %180, %182, %183 : vector<8x1xi1>, vector<8x1xf32>
    %185 = arith.addf %141, %184 : vector<8x1xf32>
    %cst_57 = arith.constant dense<0xFF800000> : vector<1xf32>
    %186 = vector.multi_reduction <maximumf>, %157, %cst_57 [1] : vector<1x128xf32> to vector<1xf32>
    %187 = vector.shape_cast %186 : vector<1xf32> to vector<1x1xf32>
    %188 = vector.broadcast %187 : vector<1x1xf32> to vector<1x128xf32>
    %189 = arith.cmpf oeq, %157, %188 : vector<1x128xf32>
    %cst_58 = arith.constant 1.280000e+02 : f32
    %190 = vector.broadcast %cst_58 : f32 to vector<1x128xf32>
    %191 = arith.select %189, %3, %190 : vector<1x128xi1>, vector<1x128xf32>
    %cst_59 = arith.constant dense<0x7F800000> : vector<1xf32>
    %192 = vector.multi_reduction <minimumf>, %191, %cst_59 [1] : vector<1x128xf32> to vector<1xf32>
    %193 = vector.shape_cast %192 : vector<1xf32> to vector<1x1xf32>
    %194 = vector.broadcast %193 : vector<1x1xf32> to vector<1x128xf32>
    %195 = arith.cmpf oeq, %3, %194 : vector<1x128xf32>
    %cst_60 = arith.constant 0.000000e+00 : f32
    %196 = vector.broadcast %cst_60 : f32 to vector<1x128xf32>
    %197 = arith.select %195, %0, %196 : vector<1x128xi1>, vector<1x128xf32>
    %cst_61 = arith.constant dense<0.000000e+00> : vector<1xf32>
    %198 = vector.multi_reduction <add>, %197, %cst_61 [1] : vector<1x128xf32> to vector<1xf32>
    %199 = vector.shape_cast %198 : vector<1xf32> to vector<1x1xf32>
    %cst_62 = arith.constant 0xFF800000 : f32
    %200 = vector.broadcast %cst_62 : f32 to vector<1x128xf32>
    %201 = arith.select %195, %200, %157 : vector<1x128xi1>, vector<1x128xf32>
    %c4_i32 = arith.constant 4 : i32
    %202 = vector.broadcast %c4_i32 : i32 to vector<1x128xi32>
    %203 = arith.cmpi eq, %4, %202 : vector<1x128xi32>
    %cst_63 = arith.constant 0.000000e+00 : f32
    %204 = vector.shape_cast %199 : vector<1x1xf32> to vector<1x1xf32>
    %205 = vector.broadcast %204 : vector<1x1xf32> to vector<1x128xf32>
    %206 = vector.broadcast %cst_63 : f32 to vector<1x128xf32>
    %207 = arith.select %203, %205, %206 : vector<1x128xi1>, vector<1x128xf32>
    %208 = arith.addf %164, %207 : vector<1x128xf32>
    %c4_i32_64 = arith.constant 4 : i32
    %209 = vector.broadcast %c4_i32_64 : i32 to vector<1x128xi32>
    %210 = arith.cmpi eq, %4, %209 : vector<1x128xi32>
    %cst_65 = arith.constant 0.000000e+00 : f32
    %211 = vector.shape_cast %187 : vector<1x1xf32> to vector<1x1xf32>
    %212 = vector.broadcast %211 : vector<1x1xf32> to vector<1x128xf32>
    %213 = vector.broadcast %cst_65 : f32 to vector<1x128xf32>
    %214 = arith.select %210, %212, %213 : vector<1x128xi1>, vector<1x128xf32>
    %215 = arith.addf %171, %214 : vector<1x128xf32>
    %c4_i32_66 = arith.constant 4 : i32
    %216 = vector.broadcast %c4_i32_66 : i32 to vector<8x1xi32>
    %217 = arith.cmpi eq, %5, %216 : vector<8x1xi32>
    %cst_67 = arith.constant 0.000000e+00 : f32
    %218 = vector.shape_cast %199 : vector<1x1xf32> to vector<1x1xf32>
    %219 = vector.broadcast %218 : vector<1x1xf32> to vector<8x1xf32>
    %220 = vector.broadcast %cst_67 : f32 to vector<8x1xf32>
    %221 = arith.select %217, %219, %220 : vector<8x1xi1>, vector<8x1xf32>
    %222 = arith.addf %178, %221 : vector<8x1xf32>
    %c4_i32_68 = arith.constant 4 : i32
    %223 = vector.broadcast %c4_i32_68 : i32 to vector<8x1xi32>
    %224 = arith.cmpi eq, %5, %223 : vector<8x1xi32>
    %cst_69 = arith.constant 0.000000e+00 : f32
    %225 = vector.shape_cast %187 : vector<1x1xf32> to vector<1x1xf32>
    %226 = vector.broadcast %225 : vector<1x1xf32> to vector<8x1xf32>
    %227 = vector.broadcast %cst_69 : f32 to vector<8x1xf32>
    %228 = arith.select %224, %226, %227 : vector<8x1xi1>, vector<8x1xf32>
    %229 = arith.addf %185, %228 : vector<8x1xf32>
    %cst_70 = arith.constant dense<0xFF800000> : vector<1xf32>
    %230 = vector.multi_reduction <maximumf>, %201, %cst_70 [1] : vector<1x128xf32> to vector<1xf32>
    %231 = vector.shape_cast %230 : vector<1xf32> to vector<1x1xf32>
    %232 = vector.broadcast %231 : vector<1x1xf32> to vector<1x128xf32>
    %233 = arith.cmpf oeq, %201, %232 : vector<1x128xf32>
    %cst_71 = arith.constant 1.280000e+02 : f32
    %234 = vector.broadcast %cst_71 : f32 to vector<1x128xf32>
    %235 = arith.select %233, %3, %234 : vector<1x128xi1>, vector<1x128xf32>
    %cst_72 = arith.constant dense<0x7F800000> : vector<1xf32>
    %236 = vector.multi_reduction <minimumf>, %235, %cst_72 [1] : vector<1x128xf32> to vector<1xf32>
    %237 = vector.shape_cast %236 : vector<1xf32> to vector<1x1xf32>
    %238 = vector.broadcast %237 : vector<1x1xf32> to vector<1x128xf32>
    %239 = arith.cmpf oeq, %3, %238 : vector<1x128xf32>
    %cst_73 = arith.constant 0.000000e+00 : f32
    %240 = vector.broadcast %cst_73 : f32 to vector<1x128xf32>
    %241 = arith.select %239, %0, %240 : vector<1x128xi1>, vector<1x128xf32>
    %cst_74 = arith.constant dense<0.000000e+00> : vector<1xf32>
    %242 = vector.multi_reduction <add>, %241, %cst_74 [1] : vector<1x128xf32> to vector<1xf32>
    %243 = vector.shape_cast %242 : vector<1xf32> to vector<1x1xf32>
    %c5_i32 = arith.constant 5 : i32
    %244 = vector.broadcast %c5_i32 : i32 to vector<1x128xi32>
    %245 = arith.cmpi eq, %4, %244 : vector<1x128xi32>
    %cst_75 = arith.constant 0.000000e+00 : f32
    %246 = vector.shape_cast %243 : vector<1x1xf32> to vector<1x1xf32>
    %247 = vector.broadcast %246 : vector<1x1xf32> to vector<1x128xf32>
    %248 = vector.broadcast %cst_75 : f32 to vector<1x128xf32>
    %249 = arith.select %245, %247, %248 : vector<1x128xi1>, vector<1x128xf32>
    %250 = arith.addf %208, %249 : vector<1x128xf32>
    %c5_i32_76 = arith.constant 5 : i32
    %251 = vector.broadcast %c5_i32_76 : i32 to vector<1x128xi32>
    %252 = arith.cmpi eq, %4, %251 : vector<1x128xi32>
    %cst_77 = arith.constant 0.000000e+00 : f32
    %253 = vector.shape_cast %231 : vector<1x1xf32> to vector<1x1xf32>
    %254 = vector.broadcast %253 : vector<1x1xf32> to vector<1x128xf32>
    %255 = vector.broadcast %cst_77 : f32 to vector<1x128xf32>
    %256 = arith.select %252, %254, %255 : vector<1x128xi1>, vector<1x128xf32>
    %257 = arith.addf %215, %256 : vector<1x128xf32>
    %c5_i32_78 = arith.constant 5 : i32
    %258 = vector.broadcast %c5_i32_78 : i32 to vector<8x1xi32>
    %259 = arith.cmpi eq, %5, %258 : vector<8x1xi32>
    %cst_79 = arith.constant 0.000000e+00 : f32
    %260 = vector.shape_cast %243 : vector<1x1xf32> to vector<1x1xf32>
    %261 = vector.broadcast %260 : vector<1x1xf32> to vector<8x1xf32>
    %262 = vector.broadcast %cst_79 : f32 to vector<8x1xf32>
    %263 = arith.select %259, %261, %262 : vector<8x1xi1>, vector<8x1xf32>
    %264 = arith.addf %222, %263 : vector<8x1xf32>
    %c5_i32_80 = arith.constant 5 : i32
    %265 = vector.broadcast %c5_i32_80 : i32 to vector<8x1xi32>
    %266 = arith.cmpi eq, %5, %265 : vector<8x1xi32>
    %cst_81 = arith.constant 0.000000e+00 : f32
    %267 = vector.shape_cast %231 : vector<1x1xf32> to vector<1x1xf32>
    %268 = vector.broadcast %267 : vector<1x1xf32> to vector<8x1xf32>
    %269 = vector.broadcast %cst_81 : f32 to vector<8x1xf32>
    %270 = arith.select %266, %268, %269 : vector<8x1xi1>, vector<8x1xf32>
    %271 = arith.addf %229, %270 : vector<8x1xf32>
    %272 = tpu.iota {dimensions = array<i32: 0>} : vector<8x128xi32>
    %273 = tpu.iota {dimensions = array<i32: 1>} : vector<8x128xi32>
    %274 = arith.cmpi sgt, %273, %272 : vector<8x128xi32>
    %c6_i32 = arith.constant 6 : i32
    %275 = vector.broadcast %c6_i32 : i32 to vector<8x128xi32>
    %276 = arith.cmpi slt, %273, %275 : vector<8x128xi32>
    %277 = arith.andi %274, %276 : vector<8x128xi1>
    %278 = vector.broadcast %264 : vector<8x1xf32> to vector<8x128xf32>
    %279 = vector.broadcast %250 : vector<1x128xf32> to vector<8x128xf32>
    %280 = arith.subf %278, %279 : vector<8x128xf32>
    %cst_82 = arith.constant 0.000000e+00 : f32
    %281 = vector.broadcast %cst_82 : f32 to vector<8x128xf32>
    %282 = arith.select %277, %280, %281 : vector<8x128xi1>, vector<8x128xf32>
    %283 = vector.broadcast %271 : vector<8x1xf32> to vector<8x128xf32>
    %284 = vector.broadcast %257 : vector<1x128xf32> to vector<8x128xf32>
    %285 = arith.subf %283, %284 : vector<8x128xf32>
    %cst_83 = arith.constant 0.000000e+00 : f32
    %286 = vector.broadcast %cst_83 : f32 to vector<8x128xf32>
    %287 = arith.select %277, %285, %286 : vector<8x128xi1>, vector<8x128xf32>
    %288 = math.log1p %287 : vector<8x128xf32>
    %cst_84 = arith.constant 0.434294492 : f32
    %289 = vector.broadcast %cst_84 : f32 to vector<8x128xf32>
    %290 = arith.mulf %288, %289 : vector<8x128xf32>
    %cst_85 = arith.constant 0.000000e+00 : f32
    %291 = vector.broadcast %cst_85 : f32 to vector<8x128xf32>
    %292 = arith.subf %291, %282 : vector<8x128xf32>
    %cst_86 = arith.constant 0.000000e+00 : f32
    %293 = vector.broadcast %cst_86 : f32 to vector<8x128xf32>
    %294 = arith.maximumf %292, %293 : vector<8x128xf32>
    %295 = math.absf %282 : vector<8x128xf32>
    %cst_87 = arith.constant 0.000000e+00 : f32
    %296 = vector.broadcast %cst_87 : f32 to vector<8x128xf32>
    %297 = arith.subf %296, %295 : vector<8x128xf32>
    %298 = math.exp %297 : vector<8x128xf32>
    %299 = math.log1p %298 : vector<8x128xf32>
    %300 = arith.addf %294, %299 : vector<8x128xf32>
    %301 = arith.mulf %290, %300 : vector<8x128xf32>
    %cst_88 = arith.constant dense<0.000000e+00> : vector<8xf32>
    %302 = vector.multi_reduction <add>, %301, %cst_88 [1] : vector<8x128xf32> to vector<8xf32>
    %303 = vector.shape_cast %302 : vector<8xf32> to vector<8x1xf32>
    %cst_89 = arith.constant dense<0.000000e+00> : vector<1xf32>
    %304 = vector.multi_reduction <add>, %303, %cst_89 [0] : vector<8x1xf32> to vector<1xf32>
    %305 = vector.shape_cast %304 : vector<1xf32> to vector<1x1xf32>
    %cst_90 = arith.constant 0.166666672 : f32
    %306 = vector.broadcast %cst_90 : f32 to vector<1x1xf32>
    %307 = arith.mulf %305, %306 : vector<1x1xf32>
    %c0_91 = arith.constant 0 : index
    %c0_92 = arith.constant 0 : index
    %308 = vector.load %arg1[%c0_91, %c0_92] : memref<1x1xf32, #tpu.memory_space<vmem>>, vector<1x1xf32>
    tpu.vector_store %arg1[%c0_91, %c0_92], %307 {strides = array<i32>} : memref<1x1xf32, #tpu.memory_space<vmem>>, vector<1x1xf32>,
    return
  }
}

</mosaic_0001>

<llo_original>
// kernel: graph_based_loss.1
$region0: #{graph_based_loss.1}
  #allocation0 [shape = 'u32[]', space=smem, size = 0x4, offset = 0x4, fixed_abs, tag = 'smem constant byte address 0x4 - core index']
  #allocation1 [shape = 'u32[144,128]{1,0:T(1,128)}', space=vmem, size = 0x12000, scoped, tag = 'internal scratch']
  %s0 = inlined_call_operand.vmem [shape: f32[2,128], index: 0, kind: input, shape index: {}]
  %s1 = inlined_call_operand.hbm [shape: f32[1,1], index: 1, kind: output, shape index: {}]
  %s2 = sld [smem:[#allocation0]]
  $region14: #{graph_based_loss.1} parent=0
    _
  %s4 = ssub.s32 1, %s2
  %s5 = scalar_select 0, %s4, %s2
  $region1: #{graph_based_loss.1} parent=0
    #allocation2 [shape = 'u8[512]{0}', space=vmem, size = 0x400, scoped, tag = 'output window, operand 0, single buffered']
    #allocation3 [shape = 's32[1]{0}', space=sflag, size = 0x4, scoped, tag = 'scoped memory for graph_based_loss.1']
    %6 = vsyncpa [#allocation3], 0
    // Predicated region
    $region2: #{graph_based_loss.1} parent=1 // pred_check
      _
    $region3: #{graph_based_loss.1} parent=1 // pred_check_branch
      %8 = sbr.rel (0) target = $region5
    $region4: #{graph_based_loss.1} parent=1 // pred_region
      _
    $region5: #{graph_based_loss.1} parent=1 // pred_fallthru
      _
    %v9 = vld [vmem:[%s0] sm:$0x1]
    %v10 = vld [vmem:[%s0 + $0x1] sm:$0x1]
    %v11 = vlaneseq
    %v12 = vand.u32 %v11, 127
    %v13 = vcvt.s32.f32 %v12
    %v14 = vlaneseq
    %v15 = vshrl.u32 %v14, 7
    %vm16 = vcmask 1040384
    %v17 = vsel %vm16, %v10, -inf
    %18 = vmax.xlane.f32.xlu0 %v17
    %v19 = vpop.xlane.xlu0 %18
    %vm20 = vcmp.eq.f32.partialorder %v10, %v19
    %v21 = vsel %vm20, %v13, 128.0
    %v22 = vsel %vm16, %v21, inf
    %23 = vmin.xlane.f32.xlu0 %v22
    %v24 = vpop.xlane.xlu0 %23
    %vm25 = vcmp.eq.f32.partialorder %v13, %v24
    %v26 = vsel %vm25, %v9, 0.0
    %v27 = vsel %vm16, %v26, 0.0
    %28 = vadd.xlane.f32.xlu0 %v27
    %v29 = vpop.xlane.xlu0 %28
    %v30 = vsel %vm25, -inf, %v10
    %vm31 = vcmp.eq.s32.totalorder %v12, 0
    %v32 = vsel %vm31, %v29, 0.0
    %v33 = vadd.f32 %v32, 0.0
    %v34 = vsel %vm31, %v19, 0.0
    %v35 = vadd.f32 %v34, 0.0
    %vm36 = vcmp.eq.s32.totalorder %v15, 0
    %v37 = vlaneseq
    %v38 = vshrl.u32 %v37, 7
    %v39 = vsub.s32 0, %v38
    %v40 = vrot.slane %v29, %v39
    %v41 = vsel %vm36, %v40, 0.0
    %v42 = vadd.f32 %v41, 0.0
    %v43 = vlaneseq
    %v44 = vshrl.u32 %v43, 7
    %v45 = vsub.s32 0, %v44
    %v46 = vrot.slane %v19, %v45
    %v47 = vsel %vm36, %v46, 0.0
    %v48 = vadd.f32 %v47, 0.0
    %v49 = vsel %vm16, %v30, -inf
    %50 = vmax.xlane.f32.xlu0 %v49
    %v51 = vpop.xlane.xlu0 %50
    %vm52 = vcmp.eq.f32.partialorder %v30, %v51
    %v53 = vsel %vm52, %v13, 128.0
    %v54 = vsel %vm16, %v53, inf
    %55 = vmin.xlane.f32.xlu0 %v54
    %v56 = vpop.xlane.xlu0 %55
    %vm57 = vcmp.eq.f32.partialorder %v13, %v56
    %v58 = vsel %vm57, %v9, 0.0
    %v59 = vsel %vm16, %v58, 0.0
    %60 = vadd.xlane.f32.xlu0 %v59
    %v61 = vpop.xlane.xlu0 %60
    %v62 = vsel %vm57, -inf, %v30
    %vm63 = vcmp.eq.s32.totalorder %v12, 1
    %v64 = vsel %vm63, %v61, 0.0
    %v65 = vadd.f32 %v33, %v64
    %v66 = vsel %vm63, %v51, 0.0
    %v67 = vadd.f32 %v35, %v66
    %vm68 = vcmp.eq.s32.totalorder %v15, 1
    %v69 = vlaneseq
    %v70 = vshrl.u32 %v69, 7
    %v71 = vsub.s32 0, %v70
    %v72 = vrot.slane %v61, %v71
    %v73 = vsel %vm68, %v72, 0.0
    %v74 = vadd.f32 %v42, %v73
    %v75 = vlaneseq
    %v76 = vshrl.u32 %v75, 7
    %v77 = vsub.s32 0, %v76
    %v78 = vrot.slane %v51, %v77
    %v79 = vsel %vm68, %v78, 0.0
    %v80 = vadd.f32 %v48, %v79
    %v81 = vsel %vm16, %v62, -inf
    %82 = vmax.xlane.f32.xlu0 %v81
    %v83 = vpop.xlane.xlu0 %82
    %vm84 = vcmp.eq.f32.partialorder %v62, %v83
    %v85 = vsel %vm84, %v13, 128.0
    %v86 = vsel %vm16, %v85, inf
    %87 = vmin.xlane.f32.xlu0 %v86
    %v88 = vpop.xlane.xlu0 %87
    %vm89 = vcmp.eq.f32.partialorder %v13, %v88
    %v90 = vsel %vm89, %v9, 0.0
    %v91 = vsel %vm16, %v90, 0.0
    %92 = vadd.xlane.f32.xlu0 %v91
    %v93 = vpop.xlane.xlu0 %92
    %v94 = vsel %vm89, -inf, %v62
    %vm95 = vcmp.eq.s32.totalorder %v12, 2
    %v96 = vsel %vm95, %v93, 0.0
    %v97 = vadd.f32 %v65, %v96
    %v98 = vsel %vm95, %v83, 0.0
    %v99 = vadd.f32 %v67, %v98
    %vm100 = vcmp.eq.s32.totalorder %v15, 2
    %v101 = vlaneseq
    %v102 = vshrl.u32 %v101, 7
    %v103 = vsub.s32 0, %v102
    %v104 = vrot.slane %v93, %v103
    %v105 = vsel %vm100, %v104, 0.0
    %v106 = vadd.f32 %v74, %v105
    %v107 = vlaneseq
    %v108 = vshrl.u32 %v107, 7
    %v109 = vsub.s32 0, %v108
    %v110 = vrot.slane %v83, %v109
    %v111 = vsel %vm100, %v110, 0.0
    %v112 = vadd.f32 %v80, %v111
    %v113 = vsel %vm16, %v94, -inf
    %114 = vmax.xlane.f32.xlu0 %v113
    %v115 = vpop.xlane.xlu0 %114
    %vm116 = vcmp.eq.f32.partialorder %v94, %v115
    %v117 = vsel %vm116, %v13, 128.0
    %v118 = vsel %vm16, %v117, inf
    %119 = vmin.xlane.f32.xlu0 %v118
    %v120 = vpop.xlane.xlu0 %119
    %vm121 = vcmp.eq.f32.partialorder %v13, %v120
    %v122 = vsel %vm121, %v9, 0.0
    %v123 = vsel %vm16, %v122, 0.0
    %124 = vadd.xlane.f32.xlu0 %v123
    %v125 = vpop.xlane.xlu0 %124
    %v126 = vsel %vm121, -inf, %v94
    %vm127 = vcmp.eq.s32.totalorder %v12, 3
    %v128 = vsel %vm127, %v125, 0.0
    %v129 = vadd.f32 %v97, %v128
    %v130 = vsel %vm127, %v115, 0.0
    %v131 = vadd.f32 %v99, %v130
    %vm132 = vcmp.eq.s32.totalorder %v15, 3
    %v133 = vlaneseq
    %v134 = vshrl.u32 %v133, 7
    %v135 = vsub.s32 0, %v134
    %v136 = vrot.slane %v125, %v135
    %v137 = vsel %vm132, %v136, 0.0
    %v138 = vadd.f32 %v106, %v137
    %v139 = vlaneseq
    %v140 = vshrl.u32 %v139, 7
    %v141 = vsub.s32 0, %v140
    %v142 = vrot.slane %v115, %v141
    %v143 = vsel %vm132, %v142, 0.0
    %v144 = vadd.f32 %v112, %v143
    %v145 = vsel %vm16, %v126, -inf
    %146 = vmax.xlane.f32.xlu0 %v145
    %v147 = vpop.xlane.xlu0 %146
    %vm148 = vcmp.eq.f32.partialorder %v126, %v147
    %v149 = vsel %vm148, %v13, 128.0
    %v150 = vsel %vm16, %v149, inf
    %151 = vmin.xlane.f32.xlu0 %v150
    %v152 = vpop.xlane.xlu0 %151
    %vm153 = vcmp.eq.f32.partialorder %v13, %v152
    %v154 = vsel %vm153, %v9, 0.0
    %v155 = vsel %vm16, %v154, 0.0
    %156 = vadd.xlane.f32.xlu0 %v155
    %v157 = vpop.xlane.xlu0 %156
    %v158 = vsel %vm153, -inf, %v126
    %vm159 = vcmp.eq.s32.totalorder %v12, 4
    %v160 = vsel %vm159, %v157, 0.0
    %v161 = vadd.f32 %v129, %v160
    %v162 = vsel %vm159, %v147, 0.0
    %v163 = vadd.f32 %v131, %v162
    %vm164 = vcmp.eq.s32.totalorder %v15, 4
    %v165 = vlaneseq
    %v166 = vshrl.u32 %v165, 7
    %v167 = vsub.s32 0, %v166
    %v168 = vrot.slane %v157, %v167
    %v169 = vsel %vm164, %v168, 0.0
    %v170 = vadd.f32 %v138, %v169
    %v171 = vlaneseq
    %v172 = vshrl.u32 %v171, 7
    %v173 = vsub.s32 0, %v172
    %v174 = vrot.slane %v147, %v173
    %v175 = vsel %vm164, %v174, 0.0
    %v176 = vadd.f32 %v144, %v175
    %v177 = vsel %vm16, %v158, -inf
    %178 = vmax.xlane.f32.xlu0 %v177
    %v179 = vpop.xlane.xlu0 %178
    %vm180 = vcmp.eq.f32.partialorder %v158, %v179
    %v181 = vsel %vm180, %v13, 128.0
    %v182 = vsel %vm16, %v181, inf
    %183 = vmin.xlane.f32.xlu0 %v182
    %v184 = vpop.xlane.xlu0 %183
    %vm185 = vcmp.eq.f32.partialorder %v13, %v184
    %v186 = vsel %vm185, %v9, 0.0
    %v187 = vsel %vm16, %v186, 0.0
    %188 = vadd.xlane.f32.xlu0 %v187
    %v189 = vpop.xlane.xlu0 %188
    %vm190 = vcmp.eq.s32.totalorder %v12, 5
    %v191 = vsel %vm190, %v189, 0.0
    %v192 = vadd.f32 %v161, %v191
    %v193 = vsel %vm190, %v179, 0.0
    %v194 = vadd.f32 %v163, %v193
    %vm195 = vcmp.eq.s32.totalorder %v15, 5
    %v196 = vlaneseq
    %v197 = vshrl.u32 %v196, 7
    %v198 = vsub.s32 0, %v197
    %v199 = vrot.slane %v189, %v198
    %v200 = vsel %vm195, %v199, 0.0
    %v201 = vadd.f32 %v170, %v200
    %v202 = vlaneseq
    %v203 = vshrl.u32 %v202, 7
    %v204 = vsub.s32 0, %v203
    %v205 = vrot.slane %v179, %v204
    %v206 = vsel %vm195, %v205, 0.0
    %v207 = vadd.f32 %v176, %v206
    %vm208 = vcmp.gt.s32.totalorder %v12, %v15
    %vm209 = vcmp.lt.s32.totalorder %v12, 6
    %vm210 = vmand %vm208, %vm209
    %v211 = vlaneseq
    %v212 = vshrl.u32 %v211, 7
    %v213 = vsub.s32 0, %v212
    %v214 = vrot.slane %v192, %v213
    %v215 = vsub.f32 %v201, %v214
    %v216 = vsel %vm210, %v215, 0.0
    %v217 = vlaneseq
    %v218 = vshrl.u32 %v217, 7
    %v219 = vsub.s32 0, %v218
    %v220 = vrot.slane %v194, %v219
    %v221 = vsub.f32 %v207, %v220
    %v222 = vsel %vm210, %v221, 0.0
    %v223 = vadd.f32 %v222, 1.0
    %v224 = vlog2.pop %v223
    %v225 = vmul.f32 %v224, 0.6931472
    %v226 = vmul.f32 -0.5, %v222
    %v227 = vadd.f32 %v226, 1.0
    %v228 = vmul.f32 %v227, %v222
    %v229 = vand.u32 2147483647, %v222
    %vm230 = vcmp.lt.f32.partialorder %v229, 0.0004427343
    %v231 = vsel %vm230, %v228, %v225
    %v232 = vmul.f32 %v231, 0.4342945
    %v233 = vsub.f32 0.0, %v216
    %v234 = vmax.f32 %v233, 0.0
    %v235 = vand.u32 2147483647, %v216
    %v236 = vsub.f32 0.0, %v235
    %v237 = vmul.f32 %v236, 1.442695
    %v238 = vpow.pop %v237
    %v239 = vadd.f32 %v238, 1.0
    %v240 = vlog2.pop %v239
    %v241 = vmul.f32 %v240, 0.6931472
    %v242 = vmul.f32 -0.5, %v238
    %v243 = vadd.f32 %v242, 1.0
    %v244 = vmul.f32 %v243, %v238
    %v245 = vand.u32 2147483647, %v238
    %vm246 = vcmp.lt.f32.partialorder %v245, 0.0004427343
    %v247 = vsel %vm246, %v244, %v241
    %v248 = vadd.f32 %v234, %v247
    %v249 = vmul.f32 %v232, %v248
    %250 = vadd.xlane.f32.xlu0 %v249
    %v251 = vpop.xlane.xlu0 %250
    %v252 = vrot.slane %v251, 4
    %v253 = vadd.f32 %v251, %v252
    %v254 = vrot.slane %v253, 2
    %v255 = vadd.f32 %v253, %v254
    %v256 = vrot.slane %v255, 1
    %v257 = vadd.f32 %v255, %v256
    %v258 = vmul.f32 %v257, 0.16666667
    %vm259 = vcmask 0
    %260 = vst.msk [vmem:[#allocation2] sm:$0x1] %vm259, %v258
    // Predicated region
    $region6: #{graph_based_loss.1} parent=1 // pred_check
      _
    $region7: #{graph_based_loss.1} parent=1 // pred_check_branch
      %262 = sbr.rel (0) target = $region9
    $region8: #{graph_based_loss.1} parent=1 // pred_region
      %s264 = ssub.s32 16, 16
      %265 = vsyncadd [#allocation3], %s264
      %s267 = sshll.u32 [#allocation2], 4
      %s268 = int_to_ptr.vmem [resolvable:$true] %s267
      %270 = dma.vmem_to_hbm [thread:$0]  %s268, 16, %s1, [#allocation3]
    $region9: #{graph_based_loss.1} parent=1 // pred_fallthru
      _
    // Predicated region
    $region10: #{graph_based_loss.1} parent=1 // pred_check
      _
    $region11: #{graph_based_loss.1} parent=1 // pred_check_branch
      %272 = sbr.rel (0) target = $region13
    $region12: #{graph_based_loss.1} parent=1 // pred_region
      %273 = dma.done [#allocation3], 16
    $region13: #{graph_based_loss.1} parent=1 // pred_fallthru
      _
    %274 = vsyncpa [#allocation3], 1

</llo_original>
